<compile_context>
chip_gen: v7x
topology: tpu7x:2x2x1
jax: 0.10.0
libtpu: 0.0.40
codegen_flags: <defaults>
</compile_context>

<pallas_src>
import functools

import jax
import jax.numpy as jnp
import numpy as np
from jax.experimental import pallas as pl
from jax.experimental.pallas import tpu as pltpu

_HALO = 128  # lane-aligned halo / margin width used by the fused stage kernel


def _leaky_relu(x, slope=0.2):
    return jnp.where(x >= 0, x, slope * x)


def _get_padding(kernel_size, stride=1, dilation=1):
    # cached_conv.get_padding, mode='centered' -> (left, right)
    p = (kernel_size - 1) * dilation + 1 - stride
    return (p // 2 + p % 2, p // 2)


def _pick_tile(T, rows, max_cols=1024, budget_bytes=2 << 20):
    """Largest T tile dividing T (multiples of 256 preferred, then 128)."""
    cap = min(max_cols, max(256, budget_bytes // (4 * max(rows, 1))))
    if T <= cap:
        return T
    for step in (256, 128):
        t = (cap // step) * step
        while t >= step:
            if T % t == 0:
                return t
            t -= step
    return T  # fallback: single tile


def _vmem_cap_bytes():
    try:
        return int(pltpu.get_tpu_info().vmem_capacity_bytes)
    except Exception:  # pragma: no cover - conservative fallback
        return 64 << 20


def _mosaic_params(semantics, vmem_need_bytes):
    # Leave headroom below physical VMEM (matters on v7x's 64 MiB per core,
    # allows >64 MiB on v5e/v6e where physical VMEM is 128 MiB).
    cap = int(0.85 * _vmem_cap_bytes())
    limit = int(min(max(int(1.5 * vmem_need_bytes) + (4 << 20), 32 << 20), cap))
    return pltpu.CompilerParams(dimension_semantics=semantics,
                                vmem_limit_bytes=limit)


# ----------------------------- Pallas kernels ------------------------------ #

def _conv1d_kernel(x_ref, w_ref, b_ref, o_ref, *, K, d, Tt, P, pre_act, use_concat):
    """Stride-1 (dilated) Conv1d over one lane-dense T tile.

    x_ref: (1, C_in, T + P)  pre-padded input, resident per batch (time = lanes)
    w_ref: (K, C_out, C_in)  per-tap weights   (or (C_out, K*C_in) if use_concat)
    b_ref: (C_out, 1) f32    o_ref: (1, C_out, Tt)
    """
    t0 = pl.multiple_of(pl.program_id(1) * Tt, Tt)
    win = x_ref[0, :, pl.ds(t0, Tt + P)]                 # (C_in, Tt + P)
    if pre_act:
        win = _leaky_relu(win)                           # lrelu(0) == 0 -> pad-safe
    win = win.astype(w_ref.dtype)
    if use_concat:
        # Tiny C_in (first layer): a single matmul over the stacked taps.
        xcat = jnp.concatenate([win[:, k * d: k * d + Tt] for k in range(K)], axis=0)
        acc = jnp.dot(w_ref[...], xcat, preferred_element_type=jnp.float32)
    else:
        acc = jnp.zeros((o_ref.shape[1], Tt), jnp.float32)
        for k in range(K):                               # tap-accumulated matmuls
            acc = acc + jnp.dot(w_ref[k], win[:, k * d: k * d + Tt],
                                preferred_element_type=jnp.float32)
    o_ref[0] = (acc + b_ref[...]).astype(o_ref.dtype)


def _down_conv_kernel(x_ref, w_ref, b_ref, o_ref, *, r, L, Tt):
    """Downsampling Conv1d (kernel 2r, stride r) on a phase-split input.

    x_ref: (1, r, C, U + 2)  phase s, column u  <->  x[:, (u-1)*r + s]
    w_ref: (2r, C_out, C)    b_ref: (C_out, 1) f32   o_ref: (1, C_out, Tt)
    """
    t0 = pl.multiple_of(pl.program_id(1) * Tt, Tt)
    cdt = w_ref.dtype
    # One fused LeakyReLU(0.2) per phase window (lrelu(0) == 0 -> pad-safe).
    acts = [_leaky_relu(x_ref[0, s, :, pl.ds(t0, Tt + 2)]).astype(cdt)
            for s in range(r)]
    acc = jnp.zeros((o_ref.shape[1], Tt), jnp.float32)
    for k in range(2 * r):                               # tap-accumulated matmuls
        q, s = divmod(k - L, r)                          # q in {-1, 0, 1}
        acc = acc + jnp.dot(w_ref[k], acts[s][:, q + 1: q + 1 + Tt],
                            preferred_element_type=jnp.float32)
    o_ref[0] = (acc + b_ref[...]).astype(o_ref.dtype)


def _stage_kernel(x_ref, w1_ref, b1_ref, w2_ref, b2_ref, o_ref, act_ref, *,
                  K, dils, Tc):
    """All Residual(DilatedUnit) layers of one ratio stage for one T chunk.

    x_ref : (1, C, T)  (revisited across chunks)   o_ref: (1, C, Tc)
    w1_ref: (n_dil, K, C, C)  b1_ref: (n_dil, C, 1) f32
    w2_ref: (n_dil, C, C)     b2_ref: (n_dil, C, 1) f32
    act_ref: (2, C, Tc + 4*_HALO) f32 ping-pong residual stream.
      layout per buffer: | guard M | halo M | chunk Tc | halo M | guard M |
    """
    C = act_ref.shape[1]
    W = act_ref.shape[2]
    M = _HALO
    c = pl.program_id(1)
    n_chunks = pl.num_programs(1)
    c0 = pl.multiple_of(c * Tc, Tc)
    cdt = w1_ref.dtype
    n_dil = len(dils)

    zrow = jnp.zeros((C, M), jnp.float32)
    # Outer guard margins: legal (zero) read targets for tap halos, never stored to.
    for buf in range(2):
        act_ref[buf, :, 0:M] = zrow
        act_ref[buf, :, W - M:W] = zrow
    # Buffer 0 data region: left halo | chunk | right halo (halo = neighbour data
    # for interior chunks, zero padding at the global signal edges).
    act_ref[0, :, M:2 * M] = zrow
    act_ref[0, :, 2 * M + Tc:3 * M + Tc] = zrow
    act_ref[0, :, 2 * M:2 * M + Tc] = x_ref[0, :, pl.ds(c0, Tc)].astype(jnp.float32)

    @pl.when(c > 0)
    def _():
        act_ref[0, :, M:2 * M] = x_ref[0, :, pl.ds(c0 - M, M)].astype(jnp.float32)

    @pl.when(c < n_chunks - 1)
    def _():
        act_ref[0, :, 2 * M + Tc:3 * M + Tc] = \
            x_ref[0, :, pl.ds(c0 + Tc, M)].astype(jnp.float32)

    for l, d in enumerate(dils):
        src = l % 2
        last = (l == n_dil - 1)
        p = (K - 1) * d
        Lp, Rp = p // 2 + p % 2, p // 2
        if last:
            s0, span = 2 * M, Tc            # final layer: only the chunk itself
        else:
            s0, span = M, Tc + 2 * M        # chunk + both halo regions

        # One activation pass over exactly the columns the taps will read.
        a = _leaky_relu(act_ref[src, :, s0 - Lp: s0 + span + Rp]).astype(cdt)
        acc = jnp.zeros((C, span), jnp.float32)
        for k in range(K):                   # tap-accumulated MXU matmuls
            acc = acc + jnp.dot(w1_ref[l, k], a[:, k * d: k * d + span],
                                preferred_element_type=jnp.float32)
        h = _leaky_relu(acc + b1_ref[l]).astype(cdt)
        h = jnp.dot(w2_ref[l], h, preferred_element_type=jnp.float32) + b2_ref[l]
        out = act_ref[src, :, s0: s0 + span] + h        # f32 residual stream

        if last:
            o_ref[0] = out.astype(o_ref.dtype)          # no trailing full-T copy
        else:
            dst = 1 - src
            act_ref[dst, :, s0: s0 + span] = out

            # At the global signal edges the halo columns must remain equal to
            # the per-layer zero padding of the reference network.
            @pl.when(c == 0)
            def _(dst=dst):
                act_ref[dst, :, M:2 * M] = zrow

            @pl.when(c == n_chunks - 1)
            def _(dst=dst):
                act_ref[dst, :, 2 * M + Tc:3 * M + Tc] = zrow


# ------------------------------ wrappers ----------------------------------- #

def pallas_conv1d(x, w, b, *, dilation=1, pre_act=False,
                  compute_dtype=jnp.float32, max_tile_cols=1024):
    """x: (B, C_in, T); w: (K, C_in, C_out) 'WIO'; b: (C_out,) -> (B, C_out, T)."""
    B, C_in, T = x.shape
    K, _, C_out = w.shape
    L, R = _get_padding(K, 1, dilation)
    P = L + R
    # TODO(synk): only the first/last convs use this wrapper pad (tiny C_in /
    # short T); the wide mid-network activations never pass through it.
    x_pad = jnp.pad(x, ((0, 0), (0, 0), (L, R))).astype(compute_dtype)
    use_concat = C_in < 8
    if use_concat:
        w_k = jnp.transpose(w, (2, 0, 1)).reshape(C_out, K * C_in).astype(compute_dtype)
        w_spec = pl.BlockSpec((C_out, K * C_in), lambda b_, t: (0, 0))
    else:
        w_k = jnp.transpose(w, (0, 2, 1)).astype(compute_dtype)   # (K, C_out, C_in)
        w_spec = pl.BlockSpec((K, C_out, C_in), lambda b_, t: (0, 0, 0))
    b2d = b.reshape(C_out, 1).astype(jnp.float32)

    Tt = _pick_tile(T, rows=C_in + 2 * C_out, max_cols=max_tile_cols)
    dsz = jnp.dtype(compute_dtype).itemsize
    vmem_need = (2 * C_in * (T + P) * dsz + 2 * C_out * Tt * 4
                 + 2 * w_k.size * dsz + C_out * 4)

    kernel = functools.partial(_conv1d_kernel, K=K, d=dilation, Tt=Tt, P=P,
                               pre_act=pre_act, use_concat=use_concat)
    return pl.pallas_call(
        kernel,
        out_shape=jax.ShapeDtypeStruct((B, C_out, T), compute_dtype),
        grid=(B, T // Tt),
        in_specs=[
            pl.BlockSpec((1, C_in, T + P), lambda b_, t: (b_, 0, 0)),
            w_spec,
            pl.BlockSpec((C_out, 1), lambda b_, t: (0, 0)),
        ],
        out_specs=pl.BlockSpec((1, C_out, Tt), lambda b_, t: (b_, 0, t)),
        compiler_params=_mosaic_params(("parallel", "parallel"), vmem_need),
    )(x_pad, w_k, b2d)


def pallas_downsample_conv(x, w, b, *, r, compute_dtype=jnp.float32,
                           max_tile_cols=1024):
    """LeakyReLU(0.2) + strided conv (kernel 2r, stride r): (B,C,T) -> (B,C_out,T//r)."""
    B, C, T = x.shape
    assert T % r == 0, "sequence length must be divisible by prod(ratios)"
    assert w.shape[0] == 2 * r
    U = T // r
    C_out = w.shape[2]
    L, _ = _get_padding(2 * r, r, 1)
    # Phase-split view: xq[b, s, c, u] = x[b, c, (u-1)*r + s] (zeros outside).
    # TODO(synk): this pad+reshape+transpose is one extra XLA relayout pass per
    # stage; fusing the strided conv into the stage epilogue needs lane-strided
    # VMEM reads, left out here for lowering safety.
    xp = jnp.pad(x, ((0, 0), (0, 0), (r, r)))
    xq = jnp.transpose(xp.reshape(B, C, U + 2, r), (0, 3, 1, 2)).astype(compute_dtype)
    wk = jnp.transpose(w, (0, 2, 1)).astype(compute_dtype)        # (2r, C_out, C)
    b2d = b.reshape(C_out, 1).astype(jnp.float32)

    Tt = _pick_tile(U, rows=r * C + 2 * C_out, max_cols=max_tile_cols)
    dsz = jnp.dtype(compute_dtype).itemsize
    vmem_need = (2 * r * C * (U + 2) * dsz + 2 * C_out * Tt * 4
                 + 2 * wk.size * dsz + C_out * 4)

    kernel = functools.partial(_down_conv_kernel, r=r, L=L, Tt=Tt)
    return pl.pallas_call(
        kernel,
        out_shape=jax.ShapeDtypeStruct((B, C_out, U), compute_dtype),
        grid=(B, U // Tt),
        in_specs=[
            pl.BlockSpec((1, r, C, U + 2), lambda b_, t: (b_, 0, 0, 0)),
            pl.BlockSpec((2 * r, C_out, C), lambda b_, t: (0, 0, 0)),
            pl.BlockSpec((C_out, 1), lambda b_, t: (0, 0)),
        ],
        out_specs=pl.BlockSpec((1, C_out, Tt), lambda b_, t: (b_, 0, t)),
        compiler_params=_mosaic_params(("parallel", "parallel"), vmem_need),
    )(xq, wk, b2d)


def pallas_res_stage(x, units, *, kernel_size, compute_dtype=jnp.float32,
                     max_tile_cols=1024):
    """Fused stack of Residual(DilatedUnit) layers: (B, C, T) -> (B, C, T)."""
    B, C, T = x.shape
    K = kernel_size
    dils = tuple(int(u['dilation']) for u in units)
    n_dil = len(dils)
    M = _HALO

    pads = [_get_padding(K, 1, d) for d in dils]
    assert max(max(lp, rp) for lp, rp in pads) <= M, "per-layer halo exceeds margin"

    # Stacked weights: w1[l, k] and w2[l] are (C_out, C_in) MXU tiles.
    w1 = jnp.stack([jnp.transpose(u['w1'], (0, 2, 1)) for u in units]
                   ).astype(compute_dtype)                         # (n_dil, K, C, C)
    b1 = jnp.stack([u['b1'].reshape(C, 1) for u in units]).astype(jnp.float32)
    w2 = jnp.stack([u['w2'][0].T for u in units]).astype(compute_dtype)  # (n_dil,C,C)
    b2 = jnp.stack([u['b2'].reshape(C, 1) for u in units]).astype(jnp.float32)

    Tc = _pick_tile(T, rows=6 * C, max_cols=max_tile_cols)
    n_chunks = T // Tc
    if n_chunks > 1:
        assert (sum(lp for lp, _ in pads) <= M and sum(rp for _, rp in pads) <= M), \
            "cumulative dilation halo exceeds the 128-column chunk margin"

    dsz = jnp.dtype(compute_dtype).itemsize
    vmem_need = (2 * C * T * dsz                     # x block (double-buffered)
                 + 2 * C * Tc * dsz                  # output chunk block
                 + 2 * (w1.size + w2.size) * dsz + (b1.size + b2.size) * 4
                 + 2 * C * (Tc + 4 * M) * 4)         # f32 ping-pong scratch

    kernel = functools.partial(_stage_kernel, K=K, dils=dils, Tc=Tc)
    return pl.pallas_call(
        kernel,
        out_shape=jax.ShapeDtypeStruct((B, C, T), compute_dtype),
        grid=(B, n_chunks),
        in_specs=[
            pl.BlockSpec((1, C, T), lambda b_, c: (b_, 0, 0)),
            pl.BlockSpec((n_dil, K, C, C), lambda b_, c: (0, 0, 0, 0)),
            pl.BlockSpec((n_dil, C, 1), lambda b_, c: (0, 0, 0)),
            pl.BlockSpec((n_dil, C, C), lambda b_, c: (0, 0, 0)),
            pl.BlockSpec((n_dil, C, 1), lambda b_, c: (0, 0, 0)),
        ],
        out_specs=pl.BlockSpec((1, C, Tc), lambda b_, c: (b_, 0, c)),
        scratch_shapes=[pltpu.VMEM((2, C, Tc + 4 * M), jnp.float32)],
        compiler_params=_mosaic_params(("parallel", "parallel"), vmem_need),
    )(x, w1, b1, w2, b2)


# --------------------------- parameter building ---------------------------- #

def init_encoder_v2(key, *, data_size, capacity, ratios, latent_size, n_out,
                    kernel_size, dilations, keep_dim=False):
    dilations_list = ([list(dilations) for _ in ratios]
                      if isinstance(dilations[0], int)
                      else [list(d) for d in dilations])

    def conv_params(k, c_in, c_out, ksz):
        kw, kb = jax.random.split(k)
        scale = 1.0 / float(np.sqrt(c_in * ksz))
        w = scale * jax.random.normal(kw, (ksz, c_in, c_out), jnp.float32)
        b = scale * jax.random.normal(kb, (c_out,), jnp.float32)
        return w, b

    keys = iter(jax.random.split(key, 128))
    layers = []
    # first conv: kernel_size*2 + 1, no pre-activation
    w, b = conv_params(next(keys), data_size, capacity, 2 * kernel_size + 1)
    layers.append(dict(kind='conv', w=w, b=b, stride=1, dilation=1, pre_act=False))

    num_channels = capacity
    for r, dils in zip(ratios, dilations_list):
        units = []
        for d in dils:
            w1, b1 = conv_params(next(keys), num_channels, num_channels, kernel_size)
            w2, b2 = conv_params(next(keys), num_channels, num_channels, 1)
            units.append(dict(w1=w1, b1=b1, w2=w2, b2=b2, dilation=d))
        layers.append(dict(kind='stage', units=units, kernel_size=kernel_size))
        out_channels = num_channels * r if keep_dim else num_channels * 2
        # LeakyReLU(0.2) fused as pre-activation of the downsampling conv
        w, b = conv_params(next(keys), num_channels, out_channels, 2 * r)
        layers.append(dict(kind='conv', w=w, b=b, stride=r, dilation=1, pre_act=True))
        num_channels = out_channels

    # final LeakyReLU(0.2) + projection to latent_size * n_out
    w, b = conv_params(next(keys), num_channels, latent_size * n_out, kernel_size)
    layers.append(dict(kind='conv', w=w, b=b, stride=1, dilation=1, pre_act=True))
    # TODO(synk): recurrent_layer / spectrogram are None in this config (not built).
    return layers


def encoder_v2_forward(layers, x_ncw, compute_dtype=jnp.float32, max_tile_cols=1024):
    """x_ncw: (B, data_size, T), same as the PyTorch module; returns NCW output."""
    x = x_ncw  # NCW already puts time on TPU lanes -- no boundary transposes.
    for layer in layers:
        if layer['kind'] == 'conv':
            if layer['stride'] == 1:
                x = pallas_conv1d(x, layer['w'], layer['b'],
                                  dilation=layer['dilation'],
                                  pre_act=layer['pre_act'],
                                  compute_dtype=compute_dtype,
                                  max_tile_cols=max_tile_cols)
            else:
                x = pallas_downsample_conv(x, layer['w'], layer['b'],
                                           r=layer['stride'],
                                           compute_dtype=compute_dtype,
                                           max_tile_cols=max_tile_cols)
        else:
            x = pallas_res_stage(x, layer['units'],
                                 kernel_size=layer['kernel_size'],
                                 compute_dtype=compute_dtype,
                                 max_tile_cols=max_tile_cols)
    return x


# --------------------------- pure-JAX reference ----------------------------- #

def _ref_conv_nwc(x_nwc, w, b_row, *, stride=1, dilation=1, pre_act=False):
    if pre_act:
        x_nwc = _leaky_relu(x_nwc)
    K = w.shape[0]
    L, R = _get_padding(K, stride, dilation)
    xp = jnp.pad(x_nwc, ((0, 0), (L, R), (0, 0)))
    y = jax.lax.conv_general_dilated(
        xp, w, window_strides=(stride,), padding='VALID', rhs_dilation=(dilation,),
        dimension_numbers=('NWC', 'WIO', 'NWC'),
        precision=jax.lax.Precision.HIGHEST)
    return y + b_row


def encoder_v2_reference(layers, x_ncw):
    x = jnp.transpose(x_ncw, (0, 2, 1))
    for layer in layers:
        if layer['kind'] == 'conv':
            x = _ref_conv_nwc(x, layer['w'], layer['b'], stride=layer['stride'],
                              dilation=layer['dilation'], pre_act=layer['pre_act'])
        else:
            for unit in layer['units']:
                h = _ref_conv_nwc(x, unit['w1'], unit['b1'],
                                  dilation=unit['dilation'], pre_act=True)
                h = jnp.dot(_leaky_relu(h), unit['w2'][0],
                            precision=jax.lax.Precision.HIGHEST) + unit['b2']
                x = x + h
    return jnp.transpose(x, (0, 2, 1))


# ---------------------------------- main ------------------------------------ #

if __name__ == "__main__":
    key = jax.random.PRNGKey(0)
    k_param, k_x = jax.random.split(key)

    B, data_size, T = 2, 2, 512
    capacity, ratios, latent_size, n_out = 8, [2, 2], 4, 1
    kernel_size, dilations = 3, [1, 3]

    layers = init_encoder_v2(k_param, data_size=data_size, capacity=capacity,
                             ratios=ratios, latent_size=latent_size, n_out=n_out,
                             kernel_size=kernel_size, dilations=dilations)

    x = jax.random.normal(k_x, (B, data_size, T), jnp.float32)
    T_out = T // int(np.prod(ratios))
    y_ref = encoder_v2_reference(layers, x)

    # f32, large (single-chunk) T tiles
    y = jax.block_until_ready(encoder_v2_forward(layers, x))
    assert y.shape == (B, latent_size * n_out, T_out), y.shape
    np.testing.assert_allclose(np.asarray(y), np.asarray(y_ref), atol=2e-3, rtol=2e-3)

    # f32, forced 128-wide tiles: exercises multi-tile grids and the
    # multi-chunk (halo-exchange) path of the fused residual stage.
    y_small = jax.block_until_ready(
        encoder_v2_forward(layers, x, max_tile_cols=128))
    np.testing.assert_allclose(np.asarray(y_small), np.asarray(y_ref),
                               atol=2e-3, rtol=2e-3)

    # bf16 activations/weights with f32 residual stream and f32 accumulation
    y_bf16 = jax.block_until_ready(
        encoder_v2_forward(layers, x, compute_dtype=jnp.bfloat16))
    assert y_bf16.shape == (B, latent_size * n_out, T_out)
    assert bool(jnp.all(jnp.isfinite(y_bf16.astype(jnp.float32))))

    print("KERNEL_OK")
</pallas_src>

<mosaic_0001>
module attributes {stable_mosaic.version = 11 : i64} {
  func.func @_conv1d_kernel(%arg0: i32, %arg1: i32, %arg2: memref<1x2x518xf32, #tpu.memory_space<vmem>>, %arg3: memref<8x14xf32, #tpu.memory_space<vmem>>, %arg4: memref<8x1xf32, #tpu.memory_space<vmem>>, %arg5: memref<1x8x512xf32, #tpu.memory_space<vmem>>) attributes {dimension_semantics = [#tpu.dimension_semantics<parallel>, #tpu.dimension_semantics<parallel>], iteration_bounds = array<i64: 2, 1>, scalar_prefetch = 0 : i64, scratch_operands = 0 : i64, tpu.core_type = #tpu.core_type<tc>, window_params = [{transform_indices = @transform_0, window_bounds = array<i64: 1, 2, 518>}, {pipeline_mode = #tpu.pipeline_mode<synchronous>, transform_indices = @transform_1, window_bounds = array<i64: 8, 14>}, {pipeline_mode = #tpu.pipeline_mode<synchronous>, transform_indices = @transform_2, window_bounds = array<i64: 8, 1>}, {transform_indices = @transform_3, window_bounds = array<i64: 1, 8, 512>}]} {
    %c512_i32 = arith.constant 512 : i32
    %0 = arith.muli %arg1, %c512_i32 : i32
    %1 = tpu.assume_multiple %0, 512 : i32
    %c0 = arith.constant 0 : index
    %c0_0 = arith.constant 0 : index
    %2 = arith.index_cast %1 : i32 to index
    %3 = vector.load %arg2[%c0, %c0_0, %2] : memref<1x2x518xf32, #tpu.memory_space<vmem>>, vector<1x2x518xf32>
    %4 = vector.shape_cast %3 : vector<1x2x518xf32> to vector<2x518xf32>
    %5 = vector.extract_strided_slice %4 {offsets = [0, 0], sizes = [2, 512], strides = [1, 1]} : vector<2x518xf32> to vector<2x512xf32>
    %6 = vector.extract_strided_slice %4 {offsets = [0, 1], sizes = [2, 512], strides = [1, 1]} : vector<2x518xf32> to vector<2x512xf32>
    %7 = vector.extract_strided_slice %4 {offsets = [0, 2], sizes = [2, 512], strides = [1, 1]} : vector<2x518xf32> to vector<2x512xf32>
    %8 = vector.extract_strided_slice %4 {offsets = [0, 3], sizes = [2, 512], strides = [1, 1]} : vector<2x518xf32> to vector<2x512xf32>
    %9 = vector.extract_strided_slice %4 {offsets = [0, 4], sizes = [2, 512], strides = [1, 1]} : vector<2x518xf32> to vector<2x512xf32>
    %10 = vector.extract_strided_slice %4 {offsets = [0, 5], sizes = [2, 512], strides = [1, 1]} : vector<2x518xf32> to vector<2x512xf32>
    %11 = vector.extract_strided_slice %4 {offsets = [0, 6], sizes = [2, 512], strides = [1, 1]} : vector<2x518xf32> to vector<2x512xf32>
    %12 = tpu.concatenate %5, %6, %7, %8, %9, %10, %11 in 0 : vector<2x512xf32>, vector<2x512xf32>, vector<2x512xf32>, vector<2x512xf32>, vector<2x512xf32>, vector<2x512xf32>, vector<2x512xf32> -> vector<14x512xf32>
    %c0_1 = arith.constant 0 : index
    %c0_2 = arith.constant 0 : index
    %13 = vector.load %arg3[%c0_1, %c0_2] : memref<8x14xf32, #tpu.memory_space<vmem>>, vector<8x14xf32>
    %cst = arith.constant dense<0.000000e+00> : vector<8x512xf32>
    %14 = tpu.matmul %13, %12, %cst {dimension_numbers = #tpu.dot_dimension_numbers<[1], [0], [0], [1], [0, 0, 1, 1], [], []>} : vector<8x14xf32>, vector<14x512xf32>, vector<8x512xf32> -> vector<8x512xf32>
    %c0_3 = arith.constant 0 : index
    %c0_4 = arith.constant 0 : index
    %15 = vector.load %arg4[%c0_3, %c0_4] : memref<8x1xf32, #tpu.memory_space<vmem>>, vector<8x1xf32>
    %16 = vector.broadcast %15 : vector<8x1xf32> to vector<8x512xf32>
    %17 = arith.addf %14, %16 : vector<8x512xf32>
    %c0_5 = arith.constant 0 : index
    %c0_6 = arith.constant 0 : index
    %c0_7 = arith.constant 0 : index
    %18 = vector.load %arg5[%c0_5, %c0_6, %c0_7] : memref<1x8x512xf32, #tpu.memory_space<vmem>>, vector<1x8x512xf32>
    %19 = vector.shape_cast %18 : vector<1x8x512xf32> to vector<8x512xf32>
    %20 = vector.shape_cast %17 : vector<8x512xf32> to vector<1x8x512xf32>
    tpu.vector_store %arg5[%c0_5, %c0_6, %c0_7], %20 {strides = array<i32>} : memref<1x8x512xf32, #tpu.memory_space<vmem>>, vector<1x8x512xf32>,
    return
  }
  func.func @transform_0(%arg0: i32, %arg1: i32) -> (i32, i32, i32) {
    %c0_i32 = arith.constant 0 : i32
    %c0_i32_0 = arith.constant 0 : i32
    %c0_i32_1 = arith.constant 0 : i32
    return %arg0, %c0_i32, %c0_i32_0 : i32, i32, i32
  }
  func.func @transform_1(%arg0: i32, %arg1: i32) -> (i32, i32) {
    %c0_i32 = arith.constant 0 : i32
    %c0_i32_0 = arith.constant 0 : i32
    %c0_i32_1 = arith.constant 0 : i32
    return %c0_i32, %c0_i32_0 : i32, i32
  }
  func.func @transform_2(%arg0: i32, %arg1: i32) -> (i32, i32) {
    %c0_i32 = arith.constant 0 : i32
    %c0_i32_0 = arith.constant 0 : i32
    %c0_i32_1 = arith.constant 0 : i32
    return %c0_i32, %c0_i32_0 : i32, i32
  }
  func.func @transform_3(%arg0: i32, %arg1: i32) -> (i32, i32, i32) {
    %c0_i32 = arith.constant 0 : i32
    %c0_i32_0 = arith.constant 0 : i32
    return %arg0, %c0_i32, %arg1 : i32, i32, i32
  }
}

</mosaic_0001>

<llo_original>
// kernel: tpu_custom_call.1
$region0: #{tpu_custom_call.1}
  #allocation0 [shape = 'u32[]', space=smem, size = 0x4, offset = 0x4, fixed_abs, tag = 'smem constant byte address 0x4 - core index']
  #allocation1 [shape = 'u32[144,128]{1,0:T(1,128)}', space=vmem, size = 0x12000, scoped, tag = 'internal scratch']
  %s0 = inlined_call_operand.hbm [shape: f32[2,2,518], index: 0, kind: input, shape index: {}]
  %s1 = inlined_call_operand.vmem [shape: f32[8,14], index: 1, kind: input, shape index: {}]
  %s2 = inlined_call_operand.vmem [shape: f32[8,1], index: 2, kind: input, shape index: {}]
  %s3 = inlined_call_operand.hbm [shape: f32[2,8,512], index: 3, kind: output, shape index: {}]
  %s4 = sld [smem:[#allocation0]]
  $region49: #{tpu_custom_call.1} parent=0
    _
  %s6 = ssub.s32 1, %s4
  %s7 = scalar_select 0, %s6, %s4
  $region1: #{tpu_custom_call.1} parent=0
    #allocation2 [shape = 'u8[10240]{0}', space=vmem, size = 0x2800, scoped, tag = 'input window, operand 0']
    #allocation3 [shape = 's32[2]{0}', space=sflag, size = 0x8, scoped, tag = 'scoped memory for tpu_custom_call.1']
    #allocation4 [shape = 's32[2]{0}', space=sflag, size = 0x8, scoped, tag = 'scoped memory for tpu_custom_call.1']
    #allocation5 [shape = 'u8[32768]{0}', space=vmem, size = 0x8000, scoped, tag = 'output window, operand 0']
    %8 = vsyncpa [#allocation3], 0
    %s9 = scalar_lea.sflag [#allocation3], 1
    %10 = vsyncpa %s9, 0
    %11 = vsyncpa [#allocation4], 0
    %s12 = scalar_lea.sflag [#allocation4], 1
    %13 = vsyncpa %s12, 0
    loop: start=0, step=1, limit=4
    $region2: #{tpu_custom_call.1} parent=1 // loop_pre_header
      _
    $region3: #{tpu_custom_call.1} parent=1 // loop_header
      %s15 = sphi 0, %s19
      %p16 = scmp.ge.s32.totalorder %s15, 4
      %s22 = sphi 0, %s34
      %s23 = sphi 0, %s30
      %s24 = sphi 0, %s22
      %s25 = sphi 0, %s23
      %s26 = sphi 0, %s24
      %s27 = sphi 0, %s25
      %s37 = sphi 0, %s39
      %s40 = sphi 0, %s37
      %s41 = sphi 0, %s40
      %s57 = sphi 0, %s41
      %s61 = sphi 0, %s61
      %s63 = sphi 0, %s61
      %s64 = sphi 0, %s63
      %s78 = sphi 0, %s64
      %s82 = sphi 0, %s82
      %s84 = sphi 0, %s82
      %s85 = sphi 0, %s84
      %s99 = sphi 0, %s85
      %s107 = sphi 0, %s109
      %s110 = sphi 0, %s107
      %s111 = sphi 0, %s110
      %s127 = sphi 0, %s111
    $region4: #{tpu_custom_call.1} parent=1 // loop_header_branch
      %18 = sbr.rel (%p16) target = $region8
    $region5: #{tpu_custom_call.1} parent=1 // loop_body
      %s20 = ssub.s32 %s15, 1
      %s21 = ssub.s32 %s15, 2
      %s28 = sadd.s32 1, %s23
      %p29 = scmp.ge.s32.totalorder %s28, 1
      %s30 = scalar_select %p29, 0, %s28
      %s31 = sadd.s32 1, %s22
      %s32 = scalar_select %p29, %s31, %s22
      %p33 = scmp.ge.s32.totalorder %s32, 2
      %s34 = scalar_select %p33, 0, %s32
      %s35 = ssub.s32 %s22, %s34
      %p36 = scmp.eq.s32.totalorder %s35, 0
      %s38 = sadd.s32 %s37, 1
      %s39 = scalar_select %p36, %s37, %s38
      %p42 = pneg %p36
      %p43 = scmp.eq.s32.totalorder %s15, 1
      %p44 = por %p42, %p43
      %p45 = scmp.ne.s32.totalorder %s37, %s40
      %p46 = scmp.eq.s32.totalorder %s15, 0
      %p47 = por %p45, %p46
      %p48 = scmp.ne.s32.totalorder %s37, %s40
      %p49 = scmp.eq.s32.totalorder %s20, 1
      %p50 = por %p48, %p49
      %p51 = scmp.ne.s32.totalorder %s40, %s41
      %p52 = scmp.eq.s32.totalorder %s20, 0
      %p53 = por %p51, %p52
      %p54 = scmp.ne.s32.totalorder %s40, %s41
      %p55 = scmp.eq.s32.totalorder %s21, 1
      %p56 = por %p54, %p55
      %p58 = scmp.ne.s32.totalorder %s41, %s57
      %p59 = scmp.eq.s32.totalorder %s21, 0
      %p60 = por %p58, %p59
      %s62 = sadd.s32 %s61, 1
      %p65 = scmp.eq.s32.totalorder %s15, 1
      %p66 = scmp.ne.s32.totalorder %s61, %s63
      %p67 = scmp.eq.s32.totalorder %s15, 0
      %p68 = por %p66, %p67
      %p69 = scmp.ne.s32.totalorder %s61, %s63
      %p70 = scmp.eq.s32.totalorder %s20, 1
      %p71 = por %p69, %p70
      %p72 = scmp.ne.s32.totalorder %s63, %s64
      %p73 = scmp.eq.s32.totalorder %s20, 0
      %p74 = por %p72, %p73
      %p75 = scmp.ne.s32.totalorder %s63, %s64
      %p76 = scmp.eq.s32.totalorder %s21, 1
      %p77 = por %p75, %p76
      %p79 = scmp.ne.s32.totalorder %s64, %s78
      %p80 = scmp.eq.s32.totalorder %s21, 0
      %p81 = por %p79, %p80
      %s83 = sadd.s32 %s82, 1
      %p86 = scmp.eq.s32.totalorder %s15, 1
      %p87 = scmp.ne.s32.totalorder %s82, %s84
      %p88 = scmp.eq.s32.totalorder %s15, 0
      %p89 = por %p87, %p88
      %p90 = scmp.ne.s32.totalorder %s82, %s84
      %p91 = scmp.eq.s32.totalorder %s20, 1
      %p92 = por %p90, %p91
      %p93 = scmp.ne.s32.totalorder %s84, %s85
      %p94 = scmp.eq.s32.totalorder %s20, 0
      %p95 = por %p93, %p94
      %p96 = scmp.ne.s32.totalorder %s84, %s85
      %p97 = scmp.eq.s32.totalorder %s21, 1
      %p98 = por %p96, %p97
      %p100 = scmp.ne.s32.totalorder %s85, %s99
      %p101 = scmp.eq.s32.totalorder %s21, 0
      %p102 = por %p100, %p101
      %s103 = ssub.s32 %s22, %s34
      %s104 = ssub.s32 %s23, %s30
      %s105 = sor.u32 %s103, %s104
      %p106 = scmp.eq.s32.totalorder %s105, 0
      %s108 = sadd.s32 %s107, 1
      %s109 = scalar_select %p106, %s107, %s108
      %p112 = pneg %p106
      %p113 = scmp.eq.s32.totalorder %s15, 1
      %p114 = por %p112, %p113
      %p115 = scmp.ne.s32.totalorder %s107, %s110
      %p116 = scmp.eq.s32.totalorder %s15, 0
      %p117 = por %p115, %p116
      %p118 = scmp.ne.s32.totalorder %s107, %s110
      %p119 = scmp.eq.s32.totalorder %s20, 1
      %p120 = por %p118, %p119
      %p121 = scmp.ne.s32.totalorder %s110, %s111
      %p122 = scmp.eq.s32.totalorder %s20, 0
      %p123 = por %p121, %p122
      %p124 = scmp.ne.s32.totalorder %s110, %s111
      %p125 = scmp.eq.s32.totalorder %s21, 1
      %p126 = por %p124, %p125
      %p128 = scmp.ne.s32.totalorder %s111, %s127
      %p129 = scmp.eq.s32.totalorder %s21, 0
      %p130 = por %p128, %p129
      %p131 = scmp.le.s32.totalorder 1, %s15
      %p132 = scmp.lt.s32.totalorder %s15, 3
      %p133 = pnand %p131, %p132
      %p134 = pneg %p133
      // Predicated region
      $region9: #{tpu_custom_call.1} parent=5 // pred_check
        _
      $region10: #{tpu_custom_call.1} parent=5 // pred_check_branch
        %136 = sbr.rel (%p133) target = $region12
      $region11: #{tpu_custom_call.1} parent=5 // pred_region
        %s137 = ssub.s32 %s15, 1
        // Predicated region
        $region13: #{tpu_custom_call.1} parent=11 // pred_check
          %p138 = pneg %p74
        $region14: #{tpu_custom_call.1} parent=11 // pred_check_branch
          %140 = sbr.rel (%p138) target = $region16
        $region15: #{tpu_custom_call.1} parent=11 // pred_region
          _
        $region16: #{tpu_custom_call.1} parent=11 // pred_fallthru
          _
        // Predicated region
        $region17: #{tpu_custom_call.1} parent=11 // pred_check
          %p141 = pneg %p95
        $region18: #{tpu_custom_call.1} parent=11 // pred_check_branch
          %143 = sbr.rel (%p141) target = $region20
        $region19: #{tpu_custom_call.1} parent=11 // pred_region
          _
        $region20: #{tpu_custom_call.1} parent=11 // pred_fallthru
          _
      $region12: #{tpu_custom_call.1} parent=5 // pred_fallthru
        _
      %p144 = scmp.lt.s32.totalorder %s15, 2
      // Predicated region
      $region21: #{tpu_custom_call.1} parent=5 // pred_check
        %p145 = pneg %p144
      $region22: #{tpu_custom_call.1} parent=5 // pred_check_branch
        %147 = sbr.rel (%p145) target = $region24
      $region23: #{tpu_custom_call.1} parent=5 // pred_region
        // Predicated region
        $region25: #{tpu_custom_call.1} parent=23 // pred_check
          %p148 = pneg %p47
        $region26: #{tpu_custom_call.1} parent=23 // pred_check_branch
          %150 = sbr.rel (%p148) target = $region28
        $region27: #{tpu_custom_call.1} parent=23 // pred_region
          %s151 = sand.u32 %s37, 1
          %s152 = scalar_lea.sflag [#allocation3], %s151
          %s153 = sand.u32 %s37, 1
          %s154 = smul.addr %s153, 10
          %s155 = scalar_lea.vmem [#allocation2], %s154
          %s157 = ssub.s32 160, 160
          %158 = vsyncadd %s152, %s157
          %s159 = smul.addr %s22, 5
          %s160 = smul.addr %s159, 32
          %s161 = scalar_lea.hbm %s0, %s160
          %s163 = sshll.u32 %s155, 4
          %s164 = int_to_ptr.vmem [resolvable:$true] %s163
          %166 = dma.hbm_to_vmem [thread:$0]  %s161, 160, %s164, %s152
        $region28: #{tpu_custom_call.1} parent=23 // pred_fallthru
          _
      $region24: #{tpu_custom_call.1} parent=5 // pred_fallthru
        _
      %p167 = scmp.le.s32.totalorder 1, %s15
      %p168 = scmp.lt.s32.totalorder %s15, 3
      %p169 = pnand %p167, %p168
      %p170 = pneg %p169
      // Predicated region
      $region29: #{tpu_custom_call.1} parent=5 // pred_check
        _
      $region30: #{tpu_custom_call.1} parent=5 // pred_check_branch
        %172 = sbr.rel (%p169) target = $region32
      $region31: #{tpu_custom_call.1} parent=5 // pred_region
        %s173 = ssub.s32 %s15, 1
        %s174 = sand.u32 %s40, 1
        %s175 = scalar_lea.sflag [#allocation3], %s174
        %s176 = sand.u32 %s40, 1
        %s177 = smul.addr %s176, 10
        %s178 = scalar_lea.vmem [#allocation2], %s177
        // Predicated region
        $region33: #{tpu_custom_call.1} parent=31 // pred_check
          %p179 = pneg %p53
        $region34: #{tpu_custom_call.1} parent=31 // pred_check_branch
          %181 = sbr.rel (%p179) target = $region36
        $region35: #{tpu_custom_call.1} parent=31 // pred_region
          %182 = dma.done %s175, 160
        $region36: #{tpu_custom_call.1} parent=31 // pred_fallthru
          _
        %s183 = sand.u32 %s40, 1
        %s184 = scalar_lea.sflag [#allocation3], %s183
        %s185 = sand.u32 %s40, 1
        %s186 = smul.addr %s185, 10
        %s187 = scalar_lea.vmem [#allocation2], %s186
        %p188 = pneg %p53
        %p189 = pneg %p50
        %p190 = pneg %p74
        %p191 = pneg %p71
        %p192 = pneg %p95
        %p193 = pneg %p92
        %p194 = pneg %p123
        %p195 = pneg %p120
        %s196 = sand.u32 %s110, 1
        %s197 = scalar_lea.sflag [#allocation4], %s196
        %s198 = sand.u32 %s110, 1
        %s199 = smul.addr %s198, 32
        %s200 = scalar_lea.vmem [#allocation5], %s199
        %s201 = smul.u32 4, %s25
        %s202 = smul.u32 %s25, 512
        %s203 = sshra.s32 %s202, 7
        %s204 = sand.u32 %s202, 127
        %s205 = smul.addr %s203, 2
        %s206 = scalar_lea.vmem %s178, %s205 [#allocation2]
        %v207 = vld [vmem:[%s206] sm:$0xff]
        %v208 = vld [vmem:[%s206 + $0x8] sm:$0x3]
        %v210 = vcombine.high %v207, %v207
        %v212 = vunpack.c.l.s4 1983009808
        %v213 = vunpack.c.0.s8 %v212
        %v214 = vlaneseq
        %v215 = vshrl.u32 %v214, 7
        %v216 = vsub.s32 %v213, %v215
        %v217 = vrot.slane %v207, %v216
        %v219 = vunpack.c.l.s4 1983009808
        %v220 = vunpack.c.0.s8 %v219
        %v221 = vlaneseq
        %v222 = vshrl.u32 %v221, 7
        %v223 = vsub.s32 %v220, %v222
        %v224 = vrot.slane %v210, %v223
        %v225 = vcombine.high %v217, %v217
        %v226 = vcombine.high %v224, %v224
        %v232 = vcombine.low %v207, %v207
        %v234 = vunpack.c.l.s4 1983009808
        %v235 = vunpack.c.0.s8 %v234
        %v236 = vlaneseq
        %v237 = vshrl.u32 %v236, 7
        %v238 = vsub.s32 %v235, %v237
        %v239 = vrot.slane %v232, %v238
        %v240 = vcombine.high %v239, %v239
        %v241 = vcombine.low %v208, %v208
        %v243 = vunpack.c.l.s4 1983009808
        %v244 = vunpack.c.0.s8 %v243
        %v245 = vlaneseq
        %v246 = vshrl.u32 %v245, 7
        %v247 = vsub.s32 %v244, %v246
        %v248 = vrot.slane %v241, %v247
        %v250 = vunpack.c.l.s4 1983009808
        %v251 = vunpack.c.0.s8 %v250
        %v252 = vlaneseq
        %v253 = vshrl.u32 %v252, 7
        %v254 = vsub.s32 %v251, %v253
        %v255 = vrot.slane %v208, %v254
        %256 = vrot.lane.b32.xlu0 %v239, 127
        %v257 = vpop.permute.xlu0 %256
        %258 = vrot.lane.b32.xlu0 %v240, 127
        %v259 = vpop.permute.xlu0 %258
        %260 = vrot.lane.b32.xlu0 %v217, 127
        %v261 = vpop.permute.xlu0 %260
        %262 = vrot.lane.b32.xlu0 %v225, 127
        %v263 = vpop.permute.xlu0 %262
        %264 = vrot.lane.b32.xlu0 %v248, 127
        %v265 = vpop.permute.xlu0 %264
        %vm266 = vcmask 1039360
        %v267 = vsel %vm266, %v257, %v259
        %v268 = vsel %vm266, %v259, %v261
        %v269 = vsel %vm266, %v261, %v263
        %v270 = vsel %vm266, %v263, %v265
        %v275 = vcombine.low %v217, %v217
        %v276 = vcombine.low %v224, %v224
        %v277 = vcombine.low %v255, %v255
        %278 = vrot.lane.b32.xlu0 %v275, 126
        %v279 = vpop.permute.xlu0 %278
        %280 = vrot.lane.b32.xlu0 %v217, 126
        %v281 = vpop.permute.xlu0 %280
        %282 = vrot.lane.b32.xlu0 %v276, 126
        %v283 = vpop.permute.xlu0 %282
        %284 = vrot.lane.b32.xlu0 %v224, 126
        %v285 = vpop.permute.xlu0 %284
        %286 = vrot.lane.b32.xlu0 %v277, 126
        %v287 = vpop.permute.xlu0 %286
        %vm288 = vcmask 1031168
        %v289 = vsel %vm288, %v279, %v281
        %v290 = vsel %vm288, %v281, %v283
        %v291 = vsel %vm288, %v283, %v285
        %v292 = vsel %vm288, %v285, %v287
        %v297 = vcombine.low %v239, %v239
        %v298 = vcombine.low %v248, %v248
        %299 = vrot.lane.b32.xlu0 %v297, 125
        %v300 = vpop.permute.xlu0 %299
        %301 = vrot.lane.b32.xlu0 %v239, 125
        %v302 = vpop.permute.xlu0 %301
        %303 = vrot.lane.b32.xlu0 %v275, 125
        %v304 = vpop.permute.xlu0 %303
        %305 = vrot.lane.b32.xlu0 %v217, 125
        %v306 = vpop.permute.xlu0 %305
        %307 = vrot.lane.b32.xlu0 %v298, 125
        %v308 = vpop.permute.xlu0 %307
        %vm309 = vcmask 1022976
        %v310 = vsel %vm309, %v300, %v302
        %v311 = vsel %vm309, %v302, %v304
        %v312 = vsel %vm309, %v304, %v306
        %v313 = vsel %vm309, %v306, %v308
        %318 = vrot.lane.b32.xlu0 %v217, 124
        %v319 = vpop.permute.xlu0 %318
        %320 = vrot.lane.b32.xlu0 %v225, 124
        %v321 = vpop.permute.xlu0 %320
        %322 = vrot.lane.b32.xlu0 %v224, 124
        %v323 = vpop.permute.xlu0 %322
        %324 = vrot.lane.b32.xlu0 %v226, 124
        %v325 = vpop.permute.xlu0 %324
        %326 = vrot.lane.b32.xlu0 %v255, 124
        %v327 = vpop.permute.xlu0 %326
        %vm328 = vcmask 1014784
        %v329 = vsel %vm328, %v319, %v321
        %v330 = vsel %vm328, %v321, %v323
        %v331 = vsel %vm328, %v323, %v325
        %v332 = vsel %vm328, %v325, %v327
        %337 = vrot.lane.b32.xlu0 %v239, 123
        %v338 = vpop.permute.xlu0 %337
        %339 = vrot.lane.b32.xlu0 %v240, 123
        %v340 = vpop.permute.xlu0 %339
        %341 = vrot.lane.b32.xlu0 %v217, 123
        %v342 = vpop.permute.xlu0 %341
        %343 = vrot.lane.b32.xlu0 %v225, 123
        %v344 = vpop.permute.xlu0 %343
        %345 = vrot.lane.b32.xlu0 %v248, 123
        %v346 = vpop.permute.xlu0 %345
        %vm347 = vcmask 1006592
        %v348 = vsel %vm347, %v338, %v340
        %v349 = vsel %vm347, %v340, %v342
        %v350 = vsel %vm347, %v342, %v344
        %v351 = vsel %vm347, %v344, %v346
        %356 = vrot.lane.b32.xlu0 %v275, 122
        %v357 = vpop.permute.xlu0 %356
        %358 = vrot.lane.b32.xlu0 %v217, 122
        %v359 = vpop.permute.xlu0 %358
        %360 = vrot.lane.b32.xlu0 %v276, 122
        %v361 = vpop.permute.xlu0 %360
        %362 = vrot.lane.b32.xlu0 %v224, 122
        %v363 = vpop.permute.xlu0 %362
        %364 = vrot.lane.b32.xlu0 %v277, 122
        %v365 = vpop.permute.xlu0 %364
        %vm366 = vcmask 998400
        %v367 = vsel %vm366, %v357, %v359
        %v368 = vsel %vm366, %v359, %v361
        %v369 = vsel %vm366, %v361, %v363
        %v370 = vsel %vm366, %v363, %v365
        %vm375 = vcmask 1041408
        %v376 = vsel %vm375, %v217, %v267
        %v377 = vsel %vm375, %v225, %v268
        %v378 = vsel %vm375, %v224, %v269
        %v379 = vsel %vm375, %v226, %v270
        %vm380 = vcmask 1043456
        %v381 = vsel %vm380, %v376, %v289
        %v382 = vsel %vm380, %v377, %v290
        %v383 = vsel %vm380, %v378, %v291
        %v384 = vsel %vm380, %v379, %v292
        %vm385 = vcmask 1045504
        %v386 = vsel %vm385, %v381, %v310
        %v387 = vsel %vm385, %v382, %v311
        %v388 = vsel %vm385, %v383, %v312
        %v389 = vsel %vm385, %v384, %v313
        %v390 = vsel %vm375, %v329, %v348
        %v391 = vsel %vm375, %v330, %v349
        %v392 = vsel %vm375, %v331, %v350
        %v393 = vsel %vm375, %v332, %v351
        %v394 = vsel %vm380, %v390, %v367
        %v395 = vsel %vm380, %v391, %v368
        %v396 = vsel %vm380, %v392, %v369
        %v397 = vsel %vm380, %v393, %v370
        %v398 = vld [vmem:[%s1] sm:$0xff]
        %v399 = vld [vmem:[%s2] sm:$0xff]
        %401 = vset.pattern.permute.xlu0 0
        %402 = vperm.xlu0 %401, %v399
        %v403 = vpop.permute.xlu0 %402
        %vm405 = vcmask 113664
        %v407 = vsel %vm405, %v398, 0
        %v410 = vsel %vm385, %v394, 0
        %v413 = vsel %vm385, %v395, 0
        %v416 = vsel %vm385, %v396, 0
        %v419 = vsel %vm385, %v397, 0
        %421 = vmatprep.subr.mxu0 %v387
        %422 = vmatpush1.msra.mxu0 %v386
        %423 = vmatprep.subr.mxu0 %v413
        %424 = vmatpush1.msra.mxu0 %v410
        %425 = vmatprep.subr.mxu0 0.0
        %426 = vmatpush1.msra.mxu0 0.0
        %427 = vmatprep.subr.mxu0 0.0
        %428 = vmatpush1.msra.mxu0 0.0
        %429 = vmatprep.subr.mxu0 0.0
        %430 = vmatpush1.msra.mxu0 0.0
        %431 = vmatprep.subr.mxu0 0.0
        %432 = vmatpush1.msra.mxu0 0.0
        %433 = vmatprep.subr.mxu0 0.0
        %434 = vmatpush1.msra.mxu0 0.0
        %435 = vmatprep.subr.mxu0 0.0
        %436 = vmatpush1.msra.mxu0 0.0
        %437 = vmatprep.subr.mxu0 0.0
        %438 = vmatpush1.msra.mxu0 0.0
        %439 = vmatprep.subr.mxu0 0.0
        %440 = vmatpush1.msra.mxu0 0.0
        %441 = vmatprep.subr.mxu0 0.0
        %442 = vmatpush1.msra.mxu0 0.0
        %443 = vmatprep.subr.mxu0 0.0
        %444 = vmatpush1.msra.mxu0 0.0
        %445 = vmatprep.subr.mxu0 0.0
        %446 = vmatpush1.msra.mxu0 0.0
        %447 = vmatprep.subr.mxu0 0.0
        %448 = vmatpush1.msra.mxu0 0.0
        %449 = vmatprep.subr.mxu0 0.0
        %450 = vmatpush1.msra.mxu0 0.0
        %451 = vmatprep.subr.mxu0 0.0
        %452 = vmatpush1.msra.mxu0 0.0
        %453 = vmatprep.subr.mxu0 0.0
        %454 = vmatpush1.msra.mxu0 0.0
        %455 = vmatprep.subr.mxu0 0.0
        %456 = vmatpush1.msra.mxu0 0.0
        %457 = vmatprep.subr.mxu0 0.0
        %458 = vmatpush1.msra.mxu0 0.0
        %459 = vmatprep.subr.mxu0 0.0
        %460 = vmatpush1.msra.mxu0 0.0
        %461 = vmatprep.subr.mxu0 0.0
        %462 = vmatpush1.msra.mxu0 0.0
        %463 = vmatprep.subr.mxu0 0.0
        %464 = vmatpush1.msra.mxu0 0.0
        %465 = vmatprep.subr.mxu0 0.0
        %466 = vmatpush1.msra.mxu0 0.0
        %467 = vmatprep.subr.mxu0 0.0
        %468 = vmatpush1.msra.mxu0 0.0
        %469 = vmatprep.subr.mxu0 0.0
        %470 = vmatpush1.msra.mxu0 0.0
        %471 = vmatprep.subr.mxu0 0.0
        %472 = vmatpush1.msra.mxu0 0.0
        %473 = vmatprep.subr.mxu0 0.0
        %474 = vmatpush1.msra.mxu0 0.0
        %475 = vmatprep.subr.mxu0 0.0
        %476 = vmatpush1.msra.mxu0 0.0
        %477 = vmatprep.subr.mxu0 0.0
        %478 = vmatpush1.msra.mxu0 0.0
        %479 = vmatprep.subr.mxu0 0.0
        %480 = vmatpush1.msra.mxu0 0.0
        %481 = vmatprep.subr.mxu0 0.0
        %482 = vmatpush1.msra.mxu0 0.0
        %483 = vmatprep.subr.mxu0 0.0
        %484 = vmatpush1.msra.mxu0 0.0
        %485 = vmatprep.mubr.f32.mxu0 0.0
        %486 = vmatmul.mubr.f32.gmra.mrb[0].mxu0 %v407
        %v487 = vpop.f32.mrb[0].mxu0
        %v488 = vadd.f32 %v403, %v487
        %v489 = vpop.f32.mrb[0].mxu0
        %v490 = vadd.f32 %v403, %v489
        %491 = vdwg.mxu0
        %492 = vmatprep.subr.mxu0 %v389
        %493 = vmatpush1.msra.mxu0 %v388
        %494 = vmatprep.subr.mxu0 %v419
        %495 = vmatpush1.msra.mxu0 %v416
        %496 = vmatprep.subr.mxu0 0.0
        %497 = vmatpush1.msra.mxu0 0.0
        %498 = vmatprep.subr.mxu0 0.0
        %499 = vmatpush1.msra.mxu0 0.0
        %500 = vmatprep.subr.mxu0 0.0
        %501 = vmatpush1.msra.mxu0 0.0
        %502 = vmatprep.subr.mxu0 0.0
        %503 = vmatpush1.msra.mxu0 0.0
        %504 = vmatprep.subr.mxu0 0.0
        %505 = vmatpush1.msra.mxu0 0.0
        %506 = vmatprep.subr.mxu0 0.0
        %507 = vmatpush1.msra.mxu0 0.0
        %508 = vmatprep.subr.mxu0 0.0
        %509 = vmatpush1.msra.mxu0 0.0
        %510 = vmatprep.subr.mxu0 0.0
        %511 = vmatpush1.msra.mxu0 0.0
        %512 = vmatprep.subr.mxu0 0.0
        %513 = vmatpush1.msra.mxu0 0.0
        %514 = vmatprep.subr.mxu0 0.0
        %515 = vmatpush1.msra.mxu0 0.0
        %516 = vmatprep.subr.mxu0 0.0
        %517 = vmatpush1.msra.mxu0 0.0
        %518 = vmatprep.subr.mxu0 0.0
        %519 = vmatpush1.msra.mxu0 0.0
        %520 = vmatprep.subr.mxu0 0.0
        %521 = vmatpush1.msra.mxu0 0.0
        %522 = vmatprep.subr.mxu0 0.0
        %523 = vmatpush1.msra.mxu0 0.0
        %524 = vmatprep.subr.mxu0 0.0
        %525 = vmatpush1.msra.mxu0 0.0
        %526 = vmatprep.subr.mxu0 0.0
        %527 = vmatpush1.msra.mxu0 0.0
        %528 = vmatprep.subr.mxu0 0.0
        %529 = vmatpush1.msra.mxu0 0.0
        %530 = vmatprep.subr.mxu0 0.0
        %531 = vmatpush1.msra.mxu0 0.0
        %532 = vmatprep.subr.mxu0 0.0
        %533 = vmatpush1.msra.mxu0 0.0
        %534 = vmatprep.subr.mxu0 0.0
        %535 = vmatpush1.msra.mxu0 0.0
        %536 = vmatprep.subr.mxu0 0.0
        %537 = vmatpush1.msra.mxu0 0.0
        %538 = vmatprep.subr.mxu0 0.0
        %539 = vmatpush1.msra.mxu0 0.0
        %540 = vmatprep.subr.mxu0 0.0
        %541 = vmatpush1.msra.mxu0 0.0
        %542 = vmatprep.subr.mxu0 0.0
        %543 = vmatpush1.msra.mxu0 0.0
        %544 = vmatprep.subr.mxu0 0.0
        %545 = vmatpush1.msra.mxu0 0.0
        %546 = vmatprep.subr.mxu0 0.0
        %547 = vmatpush1.msra.mxu0 0.0
        %548 = vmatprep.subr.mxu0 0.0
        %549 = vmatpush1.msra.mxu0 0.0
        %550 = vmatprep.subr.mxu0 0.0
        %551 = vmatpush1.msra.mxu0 0.0
        %552 = vmatprep.subr.mxu0 0.0
        %553 = vmatpush1.msra.mxu0 0.0
        %554 = vmatprep.subr.mxu0 0.0
        %555 = vmatpush1.msra.mxu0 0.0
        %556 = vmatprep.mubr.f32.mxu0 0.0
        %557 = vmatmul.mubr.f32.gmra.mrb[0].mxu0 %v407
        %v558 = vpop.f32.mrb[0].mxu0
        %v559 = vadd.f32 %v403, %v558
        %v560 = vpop.f32.mrb[0].mxu0
        %v561 = vadd.f32 %v403, %v560
        %562 = vdwg.mxu0
        %563 = vst [vmem:[%s200] sm:$0xff] %v488
        %564 = vst [vmem:[%s200 + $0x8] sm:$0xff] %v490
        %565 = vst [vmem:[%s200 + $0x10] sm:$0xff] %v559
        %566 = vst [vmem:[%s200 + $0x18] sm:$0xff] %v561
        %s567 = sand.u32 %s110, 1
        %s568 = scalar_lea.sflag [#allocation4], %s567
        %s569 = sand.u32 %s110, 1
        %s570 = smul.addr %s569, 32
        %s571 = scalar_lea.vmem [#allocation5], %s570
        // Predicated region
        $region37: #{tpu_custom_call.1} parent=31 // pred_check
          %p572 = pneg %p120
        $region38: #{tpu_custom_call.1} parent=31 // pred_check_branch
          %574 = sbr.rel (%p572) target = $region40
        $region39: #{tpu_custom_call.1} parent=31 // pred_region
          %s575 = smul.u32 4, %s25
          %s577 = ssub.s32 512, 512
          %578 = vsyncadd %s568, %s577
          %s579 = smul.addr %s24, 4
          %s580 = sadd.s32 %s575, %s579
          %s581 = smul.addr %s580, 128
          %s582 = scalar_lea.hbm %s3, %s581
          %s584 = sshll.u32 %s571, 4
          %s585 = int_to_ptr.vmem [resolvable:$true] %s584
          %587 = dma.vmem_to_hbm [thread:$0]  %s585, 512, %s582, %s568
        $region40: #{tpu_custom_call.1} parent=31 // pred_fallthru
          _
      $region32: #{tpu_custom_call.1} parent=5 // pred_fallthru
        _
      %p588 = scmp.le.s32.totalorder 2, %s15
      // Predicated region
      $region41: #{tpu_custom_call.1} parent=5 // pred_check
        %p589 = pneg %p588
      $region42: #{tpu_custom_call.1} parent=5 // pred_check_branch
        %591 = sbr.rel (%p589) target = $region44
      $region43: #{tpu_custom_call.1} parent=5 // pred_region
        %s592 = ssub.s32 %s15, 2
        // Predicated region
        $region45: #{tpu_custom_call.1} parent=43 // pred_check
          %p593 = pneg %p126
        $region46: #{tpu_custom_call.1} parent=43 // pred_check_branch
          %595 = sbr.rel (%p593) target = $region48
        $region47: #{tpu_custom_call.1} parent=43 // pred_region
          %s596 = sand.u32 %s111, 1
          %s597 = scalar_lea.sflag [#allocation4], %s596
          %s598 = sand.u32 %s111, 1
          %s599 = smul.addr %s598, 32
          %s600 = scalar_lea.vmem [#allocation5], %s599
          %601 = dma.done %s597, 512
        $region48: #{tpu_custom_call.1} parent=43 // pred_fallthru
          _
      $region44: #{tpu_custom_call.1} parent=5 // pred_fallthru
        _
    $region6: #{tpu_custom_call.1} parent=1 // loop_footer
      %s19 = sadd.s32 1, %s15
    $region7: #{tpu_custom_call.1} parent=1 // loop_footer_branch
      %14 = sbr.rel target = $region3
    $region8: #{tpu_custom_call.1} parent=1 // loop_exit
      _
    %602 = vsyncpa [#allocation3], 1
    %s603 = scalar_lea.sflag [#allocation3], 1
    %604 = vsyncpa %s603, 1
    %605 = vsyncpa [#allocation4], 1
    %s606 = scalar_lea.sflag [#allocation4], 1
    %607 = vsyncpa %s606, 1

</llo_original>
